<compile_context>
chip_gen: v7x
topology: tpu7x:2x2x1
jax: 0.10.0
libtpu: 0.0.40
codegen_flags: <defaults>
</compile_context>

<pallas_src>
import functools

import jax
import jax.numpy as jnp
from jax.experimental import pallas as pl
from jax.experimental.pallas import tpu as pltpu


# TODO(synk): ActivationBalancer has no forward-pass effect (it only modifies gradients),
# so it is intentionally omitted; only the BasicNorm math is implemented.


def _balanced_basic_norm_kernel(eps_ref, x_ref, o_ref, *, inv_d: float):
    # eps_ref: SMEM (1,) f32 holding exp(log_eps) (precomputed in the wrapper).
    # x_ref / o_ref: (tile_rows, d_model) VMEM blocks. Last grid block may be ragged;
    # its out-of-bounds rows produce values that are never written back.
    xf = x_ref[...].astype(jnp.float32)
    ssq = jnp.sum(xf * xf, axis=-1, keepdims=True)          # sum over true d_model
    scale = jax.lax.rsqrt(ssq * inv_d + eps_ref[0])          # (mean(x^2) + eps)^-0.5
    o_ref[...] = (xf * scale).astype(o_ref.dtype)


_MAX_TILE_ROWS = 1024      # past ~512-1024 rows the DMA roofline gain is <2%
_MIN_TILE_ROWS = 256       # per-grid-step overhead amortization
_TARGET_GRID_STEPS = 8     # pipelining + keeps both v7x TensorCores busy


def _vmem_budgets():
    """(vmem_limit_bytes, tile_budget_bytes) chosen per TPU generation."""
    try:
        cap = int(pltpu.get_tpu_info().vmem_capacity_bytes)
    except Exception:
        cap = 64 * 1024 * 1024                       # conservative (v7x per-TC)
    vmem_limit = min(48 * 1024 * 1024, max(16 * 1024 * 1024, cap // 2))
    tile_budget = min(16 * 1024 * 1024, vmem_limit // 3)
    return vmem_limit, tile_budget


def _choose_tile_rows(rows: int, d_model: int, itemsize: int, tile_budget: int) -> int:
    # Native sublane packing: (8,128) f32, (16,128) bf16, (32,128) int8/fp8.
    sublane = 32 if itemsize == 1 else (16 if itemsize == 2 else 8)

    # VMEM per row: double-buffered input + output tiles at the input dtype, plus
    # ~2 live full-width f32 copies inside the kernel body (xf and xf*scale).
    per_row_bytes = d_model * (4 * itemsize + 2 * 4)
    max_rows = max(sublane, (tile_budget // per_row_bytes) // sublane * sublane)
    max_rows = min(max_rows, _MAX_TILE_ROWS)
    min_tile = max(sublane, _MIN_TILE_ROWS)

    if rows <= max_rows and rows <= 2 * min_tile:
        # Small input: a single block spanning all rows. A block dim equal to the
        # full array dim is always legal, so no padding is ever needed.
        return rows

    # Aim for ~8 grid steps (>=2 so v7x's two TensorCores both get work), while
    # keeping each step >= min_tile rows and within the VMEM budget.
    target = -(-rows // _TARGET_GRID_STEPS)             # cdiv
    target = -(-target // sublane) * sublane            # round up to sublane
    tile = max(min(target, max_rows), min(min_tile, max_rows))
    tile = max(sublane, (tile // sublane) * sublane)
    return tile


def balanced_basic_norm(x, log_eps: jax.Array, embedding=None):
    """Pallas BalancedBasicNorm forward.

    x: (..., d_model) array (or a tuple (x, embedding) like the PyTorch module);
    log_eps: shape (1,) float32 learnable eps parameter stored as log.
    """
    if isinstance(x, tuple):
        x, embedding = x
        return balanced_basic_norm(x, log_eps), embedding
    assert embedding is None

    orig_shape = x.shape
    d_model = orig_shape[-1]
    x2 = x.reshape(-1, d_model)
    rows = x2.shape[0]
    itemsize = jnp.dtype(x.dtype).itemsize

    vmem_limit, tile_budget = _vmem_budgets()
    tile_rows = _choose_tile_rows(rows, d_model, itemsize, tile_budget)
    grid = (pl.cdiv(rows, tile_rows),)

    # Hoist exp(log_eps) out of the per-grid-step body.
    eps = jnp.exp(log_eps.astype(jnp.float32)).reshape((1,))

    cost = pl.CostEstimate(
        flops=3 * rows * d_model,                 # square, sum, scale
        transcendentals=rows,                     # one rsqrt per row
        bytes_accessed=2 * rows * d_model * itemsize,
    )

    out = pl.pallas_call(
        functools.partial(_balanced_basic_norm_kernel, inv_d=1.0 / float(d_model)),
        out_shape=jax.ShapeDtypeStruct((rows, d_model), x.dtype),
        grid_spec=pltpu.PrefetchScalarGridSpec(
            num_scalar_prefetch=0,
            grid=grid,
            in_specs=[
                pl.BlockSpec(memory_space=pltpu.SMEM),                 # eps scalar
                pl.BlockSpec((tile_rows, d_model), lambda i: (i, 0)),  # x rows
            ],
            out_specs=pl.BlockSpec((tile_rows, d_model), lambda i: (i, 0)),
        ),
        compiler_params=pltpu.CompilerParams(
            dimension_semantics=("parallel",),
            vmem_limit_bytes=vmem_limit,
        ),
        cost_estimate=cost,
    )(eps, x2)

    return out.reshape(orig_shape)


def reference_balanced_basic_norm(x, log_eps):
    # Pure-JAX reference of the PyTorch forward (balancer == identity in forward).
    xf = x.astype(jnp.float32)
    scales = (jnp.mean(xf * xf, axis=-1, keepdims=True) + jnp.exp(log_eps[0])) ** -0.5
    return (xf * scales).astype(x.dtype)


if __name__ == "__main__":
    key = jax.random.PRNGKey(0)
    # Deterministic parameter init, matching BasicNorm.__init__ (eps=1e-5, stored as log).
    log_eps = jnp.array([jnp.log(1e-5)], dtype=jnp.float32)

    k1, k2, k3, k4 = jax.random.split(key, 4)

    # Case 1: small transformer-ish shape (batch=2, seq=8, d_model=32); d_model < 128
    # exercises the "block last dim == full array dim" (non-lane-multiple) path.
    x1 = jax.random.normal(k1, (2, 8, 32), dtype=jnp.float32)
    out1 = jax.block_until_ready(balanced_basic_norm(x1, log_eps))
    ref1 = reference_balanced_basic_norm(x1, log_eps)
    assert out1.shape == x1.shape and out1.dtype == x1.dtype
    assert jnp.allclose(out1, ref1, rtol=1e-5, atol=1e-5), "mismatch vs reference (case 1)"

    # Case 2: row count (15) not a multiple of 8; single full-extent block, no padding.
    x2 = jax.random.normal(k2, (3, 5, 128), dtype=jnp.float32)
    out2 = jax.block_until_ready(balanced_basic_norm(x2, log_eps))
    ref2 = reference_balanced_basic_norm(x2, log_eps)
    assert out2.shape == x2.shape and out2.dtype == x2.dtype
    assert jnp.allclose(out2, ref2, rtol=1e-5, atol=1e-5), "mismatch vs reference (case 2)"

    # Case 3: 513 rows -> multi-step grid with a ragged last block (no row padding).
    x3 = jax.random.normal(k3, (1, 513, 256), dtype=jnp.float32)
    out3 = jax.block_until_ready(balanced_basic_norm(x3, log_eps))
    ref3 = reference_balanced_basic_norm(x3, log_eps)
    assert out3.shape == x3.shape and out3.dtype == x3.dtype
    assert jnp.allclose(out3, ref3, rtol=1e-5, atol=1e-5), "mismatch vs reference (case 3)"

    # Case 4: bf16 input -> 16-row sublane path, f32 compute in-kernel, ragged grid.
    x4 = jax.random.normal(k4, (2, 300, 256), dtype=jnp.float32).astype(jnp.bfloat16)
    out4 = jax.block_until_ready(balanced_basic_norm(x4, log_eps))
    ref4 = reference_balanced_basic_norm(x4, log_eps)
    assert out4.shape == x4.shape and out4.dtype == x4.dtype
    assert jnp.allclose(out4.astype(jnp.float32), ref4.astype(jnp.float32),
                        rtol=2e-2, atol=2e-2), "mismatch vs reference (case 4)"

    print("KERNEL_OK")
</pallas_src>

<mosaic_0001>
module attributes {stable_mosaic.version = 11 : i64} {
  func.func @_balanced_basic_norm_kernel(%arg0: i32, %arg1: memref<1xf32, #tpu.memory_space<smem>>, %arg2: memref<16x32xf32, #tpu.memory_space<vmem>>, %arg3: memref<16x32xf32, #tpu.memory_space<vmem>>) attributes {dimension_semantics = [#tpu.dimension_semantics<parallel>], iteration_bounds = array<i64: 1>, scalar_prefetch = 0 : i64, scratch_operands = 0 : i64, tpu.core_type = #tpu.core_type<tc>, window_params = [{transform_indices = @transform_0, window_bounds = array<i64: 1>}, {transform_indices = @transform_1, window_bounds = array<i64: 16, 32>}, {transform_indices = @transform_2, window_bounds = array<i64: 16, 32>}]} {
    %c0 = arith.constant 0 : index
    %c0_0 = arith.constant 0 : index
    %0 = vector.load %arg2[%c0, %c0_0] : memref<16x32xf32, #tpu.memory_space<vmem>>, vector<16x32xf32>
    %1 = arith.mulf %0, %0 : vector<16x32xf32>
    %cst = arith.constant dense<0.000000e+00> : vector<16xf32>
    %2 = vector.multi_reduction <add>, %1, %cst [1] : vector<16x32xf32> to vector<16xf32>
    %3 = vector.shape_cast %2 : vector<16xf32> to vector<16x1xf32>
    %cst_1 = arith.constant 3.125000e-02 : f32
    %4 = vector.broadcast %cst_1 : f32 to vector<16x1xf32>
    %5 = arith.mulf %3, %4 : vector<16x1xf32>
    %c0_2 = arith.constant 0 : index
    %6 = memref.load %arg1[%c0_2] : memref<1xf32, #tpu.memory_space<smem>>
    %7 = vector.broadcast %6 : f32 to vector<16x1xf32>
    %8 = arith.addf %5, %7 : vector<16x1xf32>
    %9 = math.rsqrt %8 : vector<16x1xf32>
    %10 = vector.broadcast %9 : vector<16x1xf32> to vector<16x32xf32>
    %11 = arith.mulf %0, %10 : vector<16x32xf32>
    %c0_3 = arith.constant 0 : index
    %c0_4 = arith.constant 0 : index
    %12 = vector.load %arg3[%c0_3, %c0_4] : memref<16x32xf32, #tpu.memory_space<vmem>>, vector<16x32xf32>
    tpu.vector_store %arg3[%c0_3, %c0_4], %11 {strides = array<i32>} : memref<16x32xf32, #tpu.memory_space<vmem>>, vector<16x32xf32>,
    return
  }
  func.func @transform_0(%arg0: i32) -> i32 {
    %c0_i32 = arith.constant 0 : i32
    %c0_i32_0 = arith.constant 0 : i32
    return %c0_i32 : i32
  }
  func.func @transform_1(%arg0: i32) -> (i32, i32) {
    %c0_i32 = arith.constant 0 : i32
    %c0_i32_0 = arith.constant 0 : i32
    return %arg0, %c0_i32 : i32, i32
  }
  func.func @transform_2(%arg0: i32) -> (i32, i32) {
    %c0_i32 = arith.constant 0 : i32
    %c0_i32_0 = arith.constant 0 : i32
    return %arg0, %c0_i32 : i32, i32
  }
}

</mosaic_0001>

<llo_original>
// kernel: tpu_custom_call.1
$region0: #{tpu_custom_call.1}
  #allocation0 [shape = 'u32[]', space=smem, size = 0x4, offset = 0x4, fixed_abs, tag = 'smem constant byte address 0x4 - core index']
  #allocation1 [shape = 'u32[144,128]{1,0:T(1,128)}', space=vmem, size = 0x12000, scoped, tag = 'internal scratch']
  #allocation2 [shape = 'f32[1]{0:T(128)S(6)}', space=smem, size = 0x200, scoped, tag = 'scoped memory for tpu_custom_call.1']
  %s0 = inlined_call_operand.<no memory space> [shape: f32[1], index: 0, kind: input, shape index: {}]
  %s1 = inlined_call_operand.hbm [shape: f32[16,32], index: 1, kind: input, shape index: {}]
  %s2 = inlined_call_operand.hbm [shape: f32[16,32], index: 2, kind: output, shape index: {}]
  %s3 = sld [smem:[#allocation0]]
  $region22: #{tpu_custom_call.1} parent=0
    _
  %s5 = ssub.s32 1, %s3
  %s6 = scalar_select 0, %s5, %s3
  %7 = sst [smem:[#allocation2]] %s0
  $region1: #{tpu_custom_call.1} parent=0
    #allocation3 [shape = 'u8[8192]{0}', space=vmem, size = 0x2000, scoped, tag = 'input window, operand 1, single buffered']
    #allocation4 [shape = 's32[1]{0}', space=sflag, size = 0x4, scoped, tag = 'scoped memory for tpu_custom_call.1']
    #allocation5 [shape = 's32[1]{0}', space=sflag, size = 0x4, scoped, tag = 'scoped memory for tpu_custom_call.1']
    #allocation6 [shape = 'u8[8192]{0}', space=vmem, size = 0x2000, scoped, tag = 'output window, operand 0, single buffered']
    %8 = vsyncpa [#allocation4], 0
    %9 = vsyncpa [#allocation5], 0
    // Predicated region
    $region2: #{tpu_custom_call.1} parent=1 // pred_check
      _
    $region3: #{tpu_custom_call.1} parent=1 // pred_check_branch
      %11 = sbr.rel (0) target = $region5
    $region4: #{tpu_custom_call.1} parent=1 // pred_region
      _
    $region5: #{tpu_custom_call.1} parent=1 // pred_fallthru
      _
    // Predicated region
    $region6: #{tpu_custom_call.1} parent=1 // pred_check
      _
    $region7: #{tpu_custom_call.1} parent=1 // pred_check_branch
      %13 = sbr.rel (0) target = $region9
    $region8: #{tpu_custom_call.1} parent=1 // pred_region
      %s15 = ssub.s32 256, 256
      %16 = vsyncadd [#allocation4], %s15
      %s17 = sshll.u32 [#allocation3], 4
      %s18 = int_to_ptr.vmem [resolvable:$true] %s17
      %23 = dma.hbm_to_vmem [thread:$0]  %s1, 256, %s18, [#allocation4], 128, 128, 8
    $region9: #{tpu_custom_call.1} parent=1 // pred_fallthru
      _
    // Predicated region
    $region10: #{tpu_custom_call.1} parent=1 // pred_check
      _
    $region11: #{tpu_custom_call.1} parent=1 // pred_check_branch
      %25 = sbr.rel (0) target = $region13
    $region12: #{tpu_custom_call.1} parent=1 // pred_region
      %26 = dma.done [#allocation4], 256
    $region13: #{tpu_custom_call.1} parent=1 // pred_fallthru
      _
    %v27 = vld [vmem:[#allocation3] sm:$0xff]
    %v28 = vld [vmem:[#allocation3 + $0x8] sm:$0xff]
    %v29 = vmul.f32 %v27, %v27
    %v30 = vmul.f32 %v28, %v28
    %vm31 = vcmask 261120
    %v32 = vsel %vm31, %v29, 0.0
    %33 = vadd.xlane.f32.xlu0 %v32
    %v34 = vpop.xlane.xlu0 %33
    %v35 = vsel %vm31, %v30, 0.0
    %36 = vadd.xlane.f32.xlu0 %v35
    %v37 = vpop.xlane.xlu0 %36
    %v38 = vmul.f32 %v34, 0.03125
    %v39 = vmul.f32 %v37, 0.03125
    %s40 = sld [smem:[#allocation2]]
    %v41 = vstv %s40
    %v42 = vadd.f32 %v38, %v41
    %v43 = vadd.f32 %v39, %v41
    %v44 = vrsqrt.pop %v42
    %v45 = vrsqrt.pop %v43
    %v46 = vmul.f32 %v27, %v44
    %v47 = vmul.f32 %v28, %v45
    %48 = vst.msk [vmem:[#allocation6] sm:$0xff] %vm31, %v46
    %49 = vst.msk [vmem:[#allocation6 + $0x8] sm:$0xff] %vm31, %v47
    // Predicated region
    $region14: #{tpu_custom_call.1} parent=1 // pred_check
      _
    $region15: #{tpu_custom_call.1} parent=1 // pred_check_branch
      %51 = sbr.rel (0) target = $region17
    $region16: #{tpu_custom_call.1} parent=1 // pred_region
      %s53 = ssub.s32 256, 256
      %54 = vsyncadd [#allocation5], %s53
      %s55 = sshll.u32 [#allocation6], 4
      %s56 = int_to_ptr.vmem [resolvable:$true] %s55
      %61 = dma.vmem_to_hbm [thread:$0]  %s56, 256, %s2, [#allocation5], 128, 128, 8
    $region17: #{tpu_custom_call.1} parent=1 // pred_fallthru
      _
    // Predicated region
    $region18: #{tpu_custom_call.1} parent=1 // pred_check
      _
    $region19: #{tpu_custom_call.1} parent=1 // pred_check_branch
      %63 = sbr.rel (0) target = $region21
    $region20: #{tpu_custom_call.1} parent=1 // pred_region
      %64 = dma.done [#allocation5], 256
    $region21: #{tpu_custom_call.1} parent=1 // pred_fallthru
      _
    %65 = vsyncpa [#allocation4], 1
    %66 = vsyncpa [#allocation5], 1

</llo_original>
